<compile_context>
chip_gen: v7x
topology: tpu7x:2x2x1
jax: 0.10.0
libtpu: 0.0.40
codegen_flags: <defaults>
</compile_context>

<pallas_src>
import math
import functools

import jax
import jax.numpy as jnp
from jax.experimental import pallas as pl
from jax.experimental.pallas import tpu as pltpu


def make_positional_encoding_buffer(d_model: int, max_len: int) -> jnp.ndarray:
    """Reproduces the PyTorch __init__ buffer exactly (shape [max_len, d_model]).

    Note: this module intentionally uses div_term_full[0::2] for sin and
    div_term_full[1::2] for cos, matching the source module (not the canonical
    shared-div_term formulation).
    """
    position = jnp.arange(max_len, dtype=jnp.float32)[:, None]            # (max_len, 1)
    div_term_full = jnp.exp(
        jnp.arange(0, d_model, dtype=jnp.float32) * (-math.log(10000.0) / d_model)
    )
    div_term_sin = div_term_full[0::2]
    div_term_cos = div_term_full[1::2]
    pe = jnp.zeros((max_len, d_model), dtype=jnp.float32)
    pe = pe.at[:, 0::2].set(jnp.sin(position * div_term_sin))
    pe = pe.at[:, 1::2].set(jnp.cos(position * div_term_cos))
    return pe


# --- tiling knobs (f32 elements) -------------------------------------------
_LANE_TILE_CAP = 32768   # multiple of 128; 8 * 32768 * 4B = 1 MiB per x block
_BATCH_TILE_CAP = 8      # sublane-friendly batch tile


def _pe_add_kernel(x_ref, pe_ref, o_ref):
    # x_ref: (TB, TL), pe_ref: (1, TL) -> broadcast add along the batch sublanes.
    y = x_ref[...].astype(jnp.float32) + pe_ref[...].astype(jnp.float32)
    o_ref[...] = y.astype(o_ref.dtype)


def _pe_add_dropout_kernel(x_ref, pe_ref, u_ref, o_ref, *, p: float):
    # Inverted dropout: keep w.p. (1-p), scale kept values by 1/(1-p).
    y = x_ref[...].astype(jnp.float32) + pe_ref[...].astype(jnp.float32)
    keep = u_ref[...] >= jnp.float32(p)
    y = jnp.where(keep, y * jnp.float32(1.0 / (1.0 - p)), jnp.zeros_like(y))
    o_ref[...] = y.astype(o_ref.dtype)


def positional_encoding_forward(x: jnp.ndarray,
                                pe: jnp.ndarray,
                                *,
                                dropout_p: float = 0.1,
                                training: bool = False,
                                rng_key=None) -> jnp.ndarray:
    """x: [B, S, D]. Returns dropout(x + pe[:S, :]) (dropout only in training)."""
    B, S, D = x.shape
    L = S * D

    # Lane-dense 2-D slabs: out/x last dim = S*D (multiple of 128 for D=32, S=8).
    x2 = x.reshape(B, L)
    pe2 = pe[:S, :].astype(jnp.float32).reshape(1, L)

    apply_dropout = bool(training) and float(dropout_p) > 0.0
    if apply_dropout and float(dropout_p) >= 1.0:
        # PyTorch Dropout(p=1.0) zeroes everything in training mode.
        return jnp.zeros_like(x)

    # Tile sizes: big lane tiles (roofline-friendly), modest VMEM footprint
    # (<= ~1 MiB per block => double-buffered x/out/u + resident pe << 16 MiB).
    TL = L if L <= _LANE_TILE_CAP else _LANE_TILE_CAP
    TB = B if B <= _BATCH_TILE_CAP else _BATCH_TILE_CAP
    grid = (pl.cdiv(L, TL), pl.cdiv(B, TB))   # batch axis innermost -> pe stays resident

    x_spec = pl.BlockSpec((TB, TL), lambda l, b: (b, l))
    pe_spec = pl.BlockSpec((1, TL), lambda l, b: (0, l))   # constant along inner axis
    out_spec = pl.BlockSpec((TB, TL), lambda l, b: (b, l))

    compiler_params = pltpu.CompilerParams(
        dimension_semantics=("parallel", "parallel"),
        vmem_limit_bytes=32 * 1024 * 1024,
    )

    if apply_dropout:
        # TODO(synk): in-kernel pltpu.prng_random_bits would avoid this extra
        # HBM pass, but prng_seed has no CPU/interpret lowering in the sandbox.
        if rng_key is None:
            rng_key = jax.random.PRNGKey(0)
        u = jax.random.uniform(rng_key, (B, L), dtype=jnp.float32)
        kernel = functools.partial(_pe_add_dropout_kernel, p=float(dropout_p))
        out2 = pl.pallas_call(
            kernel,
            out_shape=jax.ShapeDtypeStruct((B, L), x.dtype),
            grid=grid,
            in_specs=[x_spec, pe_spec, x_spec],   # u tiled like x
            out_specs=out_spec,
            compiler_params=compiler_params,
        )(x2, pe2, u)
    else:
        out2 = pl.pallas_call(
            _pe_add_kernel,
            out_shape=jax.ShapeDtypeStruct((B, L), x.dtype),
            grid=grid,
            in_specs=[x_spec, pe_spec],
            out_specs=out_spec,
            compiler_params=compiler_params,
        )(x2, pe2)

    return out2.reshape(B, S, D)


if __name__ == "__main__":
    # Small shapes consistent with the forward: [batch, seq_len, d_model]
    B, S, D = 2, 8, 32
    MAX_LEN = 64

    key = jax.random.PRNGKey(0)
    x = jax.random.normal(key, (B, S, D), dtype=jnp.float32)
    pe = make_positional_encoding_buffer(D, MAX_LEN)

    # Eval-mode forward (dropout = identity): exact semantics vs. JAX reference.
    out_eval = jax.block_until_ready(
        positional_encoding_forward(x, pe, dropout_p=0.1, training=False))
    ref_eval = x + pe[None, :S, :]
    assert out_eval.shape == (B, S, D)
    assert jnp.allclose(out_eval, ref_eval, atol=1e-6, rtol=1e-6), "eval-mode mismatch"

    # Training-mode forward: inverted dropout with mask drawn from rng_key.
    p = 0.3
    dkey = jax.random.PRNGKey(123)
    out_train = jax.block_until_ready(
        positional_encoding_forward(x, pe, dropout_p=p, training=True, rng_key=dkey))
    u = jax.random.uniform(dkey, (B, S * D), dtype=jnp.float32).reshape(B, S, D)
    ref_train = jnp.where(u >= p, ref_eval / (1.0 - p), 0.0)
    assert out_train.shape == (B, S, D)
    assert jnp.allclose(out_train, ref_train, atol=1e-6, rtol=1e-6), "train-mode mismatch"

    print("KERNEL_OK")
</pallas_src>

<mosaic_0001>
module attributes {stable_mosaic.version = 11 : i64} {
  func.func @_pe_add_kernel(%arg0: i32, %arg1: i32, %arg2: memref<2x256xf32, #tpu.memory_space<vmem>>, %arg3: memref<1x256xf32, #tpu.memory_space<vmem>>, %arg4: memref<2x256xf32, #tpu.memory_space<vmem>>) attributes {dimension_semantics = [#tpu.dimension_semantics<parallel>, #tpu.dimension_semantics<parallel>], iteration_bounds = array<i64: 1, 1>, scalar_prefetch = 0 : i64, scratch_operands = 0 : i64, tpu.core_type = #tpu.core_type<tc>, window_params = [{transform_indices = @transform_0, window_bounds = array<i64: 2, 256>}, {transform_indices = @transform_1, window_bounds = array<i64: 1, 256>}, {transform_indices = @transform_2, window_bounds = array<i64: 2, 256>}]} {
    %c0 = arith.constant 0 : index
    %c0_0 = arith.constant 0 : index
    %0 = vector.load %arg2[%c0, %c0_0] : memref<2x256xf32, #tpu.memory_space<vmem>>, vector<2x256xf32>
    %c0_1 = arith.constant 0 : index
    %c0_2 = arith.constant 0 : index
    %1 = vector.load %arg3[%c0_1, %c0_2] : memref<1x256xf32, #tpu.memory_space<vmem>>, vector<1x256xf32>
    %2 = vector.broadcast %1 : vector<1x256xf32> to vector<2x256xf32>
    %3 = arith.addf %0, %2 : vector<2x256xf32>
    %c0_3 = arith.constant 0 : index
    %c0_4 = arith.constant 0 : index
    %4 = vector.load %arg4[%c0_3, %c0_4] : memref<2x256xf32, #tpu.memory_space<vmem>>, vector<2x256xf32>
    tpu.vector_store %arg4[%c0_3, %c0_4], %3 {strides = array<i32>} : memref<2x256xf32, #tpu.memory_space<vmem>>, vector<2x256xf32>,
    return
  }
  func.func @transform_0(%arg0: i32, %arg1: i32) -> (i32, i32) {
    %c0_i32 = arith.constant 0 : i32
    return %arg1, %arg0 : i32, i32
  }
  func.func @transform_1(%arg0: i32, %arg1: i32) -> (i32, i32) {
    %c0_i32 = arith.constant 0 : i32
    %c0_i32_0 = arith.constant 0 : i32
    return %c0_i32, %arg0 : i32, i32
  }
  func.func @transform_2(%arg0: i32, %arg1: i32) -> (i32, i32) {
    %c0_i32 = arith.constant 0 : i32
    return %arg1, %arg0 : i32, i32
  }
}

</mosaic_0001>

<llo_original>
// kernel: tpu_custom_call.1
$region0: #{tpu_custom_call.1}
  #allocation0 [shape = 'u32[]', space=smem, size = 0x4, offset = 0x4, fixed_abs, tag = 'smem constant byte address 0x4 - core index']
  #allocation1 [shape = 'u32[144,128]{1,0:T(1,128)}', space=vmem, size = 0x12000, scoped, tag = 'internal scratch']
  %s0 = inlined_call_operand.hbm [shape: f32[2,256], index: 0, kind: input, shape index: {}]
  %s1 = inlined_call_operand.vmem [shape: f32[1,256], index: 1, kind: input, shape index: {}]
  %s2 = inlined_call_operand.hbm [shape: f32[2,256], index: 2, kind: output, shape index: {}]
  %s3 = sld [smem:[#allocation0]]
  $region22: #{tpu_custom_call.1} parent=0
    _
  %s5 = ssub.s32 1, %s3
  %s6 = scalar_select 0, %s5, %s3
  $region1: #{tpu_custom_call.1} parent=0
    #allocation2 [shape = 'u8[2048]{0}', space=vmem, size = 0x800, scoped, tag = 'input window, operand 0, single buffered']
    #allocation3 [shape = 's32[1]{0}', space=sflag, size = 0x4, scoped, tag = 'scoped memory for tpu_custom_call.1']
    #allocation4 [shape = 's32[1]{0}', space=sflag, size = 0x4, scoped, tag = 'scoped memory for tpu_custom_call.1']
    #allocation5 [shape = 'u8[2048]{0}', space=vmem, size = 0x800, scoped, tag = 'output window, operand 0, single buffered']
    %7 = vsyncpa [#allocation3], 0
    %8 = vsyncpa [#allocation4], 0
    // Predicated region
    $region2: #{tpu_custom_call.1} parent=1 // pred_check
      _
    $region3: #{tpu_custom_call.1} parent=1 // pred_check_branch
      %10 = sbr.rel (0) target = $region5
    $region4: #{tpu_custom_call.1} parent=1 // pred_region
      %s12 = ssub.s32 64, 64
      %13 = vsyncadd [#allocation3], %s12
      %s15 = sshll.u32 [#allocation2], 4
      %s16 = int_to_ptr.vmem [resolvable:$true] %s15
      %18 = dma.hbm_to_vmem [thread:$0]  %s0, 64, %s16, [#allocation3]
    $region5: #{tpu_custom_call.1} parent=1 // pred_fallthru
      _
    // Predicated region
    $region6: #{tpu_custom_call.1} parent=1 // pred_check
      _
    $region7: #{tpu_custom_call.1} parent=1 // pred_check_branch
      %20 = sbr.rel (0) target = $region9
    $region8: #{tpu_custom_call.1} parent=1 // pred_region
      _
    $region9: #{tpu_custom_call.1} parent=1 // pred_fallthru
      _
    // Predicated region
    $region10: #{tpu_custom_call.1} parent=1 // pred_check
      _
    $region11: #{tpu_custom_call.1} parent=1 // pred_check_branch
      %22 = sbr.rel (0) target = $region13
    $region12: #{tpu_custom_call.1} parent=1 // pred_region
      %23 = dma.done [#allocation3], 64
    $region13: #{tpu_custom_call.1} parent=1 // pred_fallthru
      _
    %v24 = vld [vmem:[#allocation2] sm:$0xf]
    %v25 = vld [vmem:[%s1] sm:$0x3]
    %v27 = vlaneseq
    %v28 = vshrl.u32 %v27, 7
    %v29 = vsub.s32 0, %v28
    %v30 = vrot.slane %v25, %v29
    %v31 = vlaneseq
    %v32 = vshrl.u32 %v31, 7
    %v33 = vsub.s32 1, %v32
    %v34 = vrot.slane %v25, %v33
    %v35 = vcombine.low %v30, %v34
    %v37 = vunpack.c.l.s4 1983009808
    %v38 = vunpack.c.0.s8 %v37
    %v39 = vlaneseq
    %v40 = vshrl.u32 %v39, 7
    %v41 = vsub.s32 %v38, %v40
    %v42 = vrot.slane %v35, %v41
    %v44 = vadd.f32 %v24, %v42
    %45 = vst [vmem:[#allocation5] sm:$0xf] %v44
    // Predicated region
    $region14: #{tpu_custom_call.1} parent=1 // pred_check
      _
    $region15: #{tpu_custom_call.1} parent=1 // pred_check_branch
      %47 = sbr.rel (0) target = $region17
    $region16: #{tpu_custom_call.1} parent=1 // pred_region
      %s49 = ssub.s32 64, 64
      %50 = vsyncadd [#allocation4], %s49
      %s52 = sshll.u32 [#allocation5], 4
      %s53 = int_to_ptr.vmem [resolvable:$true] %s52
      %55 = dma.vmem_to_hbm [thread:$0]  %s53, 64, %s2, [#allocation4]
    $region17: #{tpu_custom_call.1} parent=1 // pred_fallthru
      _
    // Predicated region
    $region18: #{tpu_custom_call.1} parent=1 // pred_check
      _
    $region19: #{tpu_custom_call.1} parent=1 // pred_check_branch
      %57 = sbr.rel (0) target = $region21
    $region20: #{tpu_custom_call.1} parent=1 // pred_region
      %58 = dma.done [#allocation4], 64
    $region21: #{tpu_custom_call.1} parent=1 // pred_fallthru
      _
    %59 = vsyncpa [#allocation3], 1
    %60 = vsyncpa [#allocation4], 1

</llo_original>
